<compile_context>
chip_gen: v7x
topology: tpu7x:2x2x1
jax: 0.10.0
libtpu: 0.0.40
codegen_flags: <defaults>
</compile_context>

<pallas_src>
import functools

import jax
import jax.numpy as jnp
from jax import lax
from jax.experimental import pallas as pl
from jax.experimental.pallas import tpu as pltpu

EPS = 1e-5


def _round_up(n, m):
    return ((n + m - 1) // m) * m


def recommender_kernel(x_ref, w1_ref, b1_ref, w2_ref, b2_ref, w3_ref, b3_ref, o_ref):
    # x_ref: (TB, D_in). Contract the feature axis so batch rides the lane axis:
    # (H1, D_in) x (TB, D_in) -> (H1, TB), no transpose ever materializes in HBM.
    h1 = lax.dot_general(
        w1_ref[...], x_ref[...],
        dimension_numbers=(((1,), (1,)), ((), ())),
        preferred_element_type=jnp.float32,
    ) + b1_ref[...]
    h1 = jnp.maximum(h1, 0.0)                      # relu (dropout == identity in eval)

    # fc2 (+ folded BN2) + relu: (H2, H1) x (H1, TB) -> (H2, TB)
    h2 = jnp.dot(w2_ref[...], h1, preferred_element_type=jnp.float32) + b2_ref[...]
    h2 = jnp.maximum(h2, 0.0)

    # fc3: (1, H2) x (H2, TB) -> lane-dense (1, TB)
    o_ref[...] = jnp.dot(w3_ref[...], h2, preferred_element_type=jnp.float32) + b3_ref[...]


def _fold_bn_into_linear(w, b, gamma, beta, rmean, rvar, eps=EPS):
    """Eval-mode BN folded into a preceding Linear (PyTorch (out, in) layout).

    y = ((x @ W^T + b) - rm) * g / sqrt(rv + eps) + beta
      =  x @ (W * s)^T + ((b - rm) * s + beta),   s = g / sqrt(rv + eps)
    """
    s = gamma * lax.rsqrt(rvar + eps)
    w_f = w * s[:, None]                           # (out, in)
    b_f = (b - rmean) * s + beta                   # (out,)
    return w_f, b_f[:, None]                       # bias as (out, 1): column broadcast


def fold_params(params):
    """One-time (per weight set) BN folding + bias reshapes; keep out of the per-call path."""
    w1f, b1f = _fold_bn_into_linear(params["w1"], params["b1"], params["g1"],
                                    params["be1"], params["rm1"], params["rv1"])
    w2f, b2f = _fold_bn_into_linear(params["w2"], params["b2"], params["g2"],
                                    params["be2"], params["rm2"], params["rv2"])
    return dict(
        w1=w1f, b1=b1f,
        w2=w2f, b2=b2f,
        w3=params["w3"],                           # (1, H2)
        b3=params["b3"].reshape(1, 1),             # (1, 1)
    )


@functools.partial(jax.jit, static_argnames=("tile_b",))
def recommender_forward(x, folded, *, tile_b=8192):
    """x: (B, input_size) f32, folded = fold_params(...). Returns (B,) f32 (== .squeeze())."""
    B, D_in = x.shape
    H1 = folded["w1"].shape[0]
    H2 = folded["w2"].shape[0]

    # Batch tile: multiple of 128 (lane width), capped at tile_b (sweep 4K-32K per chip;
    # 8K is safe under every generation's default scoped-VMEM budget: 32*TB*4B per buffer).
    TB = min(tile_b, _round_up(B, 128))
    grid = (pl.cdiv(B, TB),)                       # ragged last block handled by Pallas

    flops = 2 * B * (D_in * H1 + H1 * H2 + H2)
    bytes_accessed = 4 * (B * D_in + B                       # activation stream in/out
                          + H1 * D_in + H1 + H2 * H1 + H2 + H2 + 1)  # weights/biases

    out = pl.pallas_call(
        recommender_kernel,
        out_shape=jax.ShapeDtypeStruct((1, B), jnp.float32),
        grid_spec=pltpu.PrefetchScalarGridSpec(
            num_scalar_prefetch=0,
            grid=grid,
            in_specs=[
                pl.BlockSpec((TB, D_in), lambda i: (i, 0)),   # activation stream
                pl.BlockSpec((H1, D_in), lambda i: (0, 0)),   # weights resident in VMEM
                pl.BlockSpec((H1, 1), lambda i: (0, 0)),
                pl.BlockSpec((H2, H1), lambda i: (0, 0)),
                pl.BlockSpec((H2, 1), lambda i: (0, 0)),
                pl.BlockSpec((1, H2), lambda i: (0, 0)),
                pl.BlockSpec((1, 1), lambda i: (0, 0)),
            ],
            out_specs=pl.BlockSpec((1, TB), lambda i: (0, i)),
        ),
        compiler_params=pltpu.CompilerParams(
            dimension_semantics=("parallel",),     # shard batch tiles across v7x's 2 TCs
        ),
        cost_estimate=pl.CostEstimate(
            flops=flops, transcendentals=0, bytes_accessed=bytes_accessed),
    )(x, folded["w1"], folded["b1"], folded["w2"], folded["b2"], folded["w3"], folded["b3"])

    # .squeeze(): (1, B) -> (B,)  (fuses into the jitted wrapper)
    return out[0]


def init_params(key, input_size, hidden_units):
    h2 = hidden_units // 2
    ks = jax.random.split(key, 8)

    def lin(kw, kb, fan_in, fan_out):
        # PyTorch Linear default init: U(-1/sqrt(fan_in), 1/sqrt(fan_in)); W is (out, in).
        bound = 1.0 / jnp.sqrt(jnp.float32(fan_in))
        w = jax.random.uniform(kw, (fan_out, fan_in), jnp.float32, -bound, bound)
        b = jax.random.uniform(kb, (fan_out,), jnp.float32, -bound, bound)
        return w, b

    w1, b1 = lin(ks[0], ks[1], input_size, hidden_units)
    w2, b2 = lin(ks[2], ks[3], hidden_units, h2)
    w3, b3 = lin(ks[4], ks[5], h2, 1)

    # BatchNorm params / running stats, deterministic but non-trivial.
    g1 = 1.0 + 0.1 * jax.random.normal(ks[6], (hidden_units,), jnp.float32)
    be1 = 0.05 * jnp.arange(hidden_units, dtype=jnp.float32)
    rm1 = 0.01 * jnp.arange(hidden_units, dtype=jnp.float32)
    rv1 = jnp.full((hidden_units,), 0.9, jnp.float32)

    g2 = 1.0 + 0.1 * jax.random.normal(ks[7], (h2,), jnp.float32)
    be2 = -0.03 * jnp.arange(h2, dtype=jnp.float32)
    rm2 = 0.02 * jnp.arange(h2, dtype=jnp.float32)
    rv2 = jnp.full((h2,), 1.1, jnp.float32)

    return dict(
        w1=w1, b1=b1, g1=g1, be1=be1, rm1=rm1, rv1=rv1,
        w2=w2, b2=b2, g2=g2, be2=be2, rm2=rm2, rv2=rv2,
        w3=w3, b3=b3,
    )


def reference_forward(x, p):
    """Pure-JAX reference with UNfolded BN (eval-mode PyTorch semantics)."""
    h1 = x @ p["w1"].T + p["b1"]
    h1 = (h1 - p["rm1"]) * lax.rsqrt(p["rv1"] + EPS) * p["g1"] + p["be1"]
    h1 = jnp.maximum(h1, 0.0)
    h2 = h1 @ p["w2"].T + p["b2"]
    h2 = (h2 - p["rm2"]) * lax.rsqrt(p["rv2"] + EPS) * p["g2"] + p["be2"]
    h2 = jnp.maximum(h2, 0.0)
    return (h2 @ p["w3"].T + p["b3"]).reshape(x.shape[0])


if __name__ == "__main__":
    input_size = 32
    hidden_units = 64

    key = jax.random.PRNGKey(0)
    kx, kp, kx2 = jax.random.split(key, 3)
    params = init_params(kp, input_size, hidden_units)
    folded = fold_params(params)           # hoisted: once per weight set, not per call

    # Small batch: single tile, block wider than the array (masked edge DMA).
    batch = 8
    x = jax.random.normal(kx, (batch, input_size), jnp.float32)
    out = jax.block_until_ready(recommender_forward(x, folded))
    ref = reference_forward(x, params)
    assert out.shape == (batch,)
    assert jnp.allclose(out, ref, atol=1e-4, rtol=1e-4)

    # Multi-tile grid with a ragged last block (B=300, TB=128 -> grid=3, tail=44).
    batch2 = 300
    x2 = jax.random.normal(kx2, (batch2, input_size), jnp.float32)
    out2 = jax.block_until_ready(recommender_forward(x2, folded, tile_b=128))
    ref2 = reference_forward(x2, params)
    assert out2.shape == (batch2,)
    assert jnp.allclose(out2, ref2, atol=1e-4, rtol=1e-4)

    # Default (large) tile path on the same data: single tile, TB = round_up(300,128).
    out3 = jax.block_until_ready(recommender_forward(x2, folded))
    assert jnp.allclose(out3, ref2, atol=1e-4, rtol=1e-4)

    # TODO(synk): training-mode BatchNorm (batch stats + running-stat update) and
    # Dropout RNG are not implemented; this kernel is eval/inference only.
    print("KERNEL_OK")
</pallas_src>

<mosaic_0001>
module attributes {stable_mosaic.version = 11 : i64} {
  func.func @recommender_kernel(%arg0: i32, %arg1: memref<128x32xf32, #tpu.memory_space<vmem>>, %arg2: memref<64x32xf32, #tpu.memory_space<vmem>>, %arg3: memref<64x1xf32, #tpu.memory_space<vmem>>, %arg4: memref<32x64xf32, #tpu.memory_space<vmem>>, %arg5: memref<32x1xf32, #tpu.memory_space<vmem>>, %arg6: memref<1x32xf32, #tpu.memory_space<vmem>>, %arg7: memref<1x1xf32, #tpu.memory_space<vmem>>, %arg8: memref<1x128xf32, #tpu.memory_space<vmem>>) attributes {dimension_semantics = [#tpu.dimension_semantics<parallel>], iteration_bounds = array<i64: 1>, scalar_prefetch = 0 : i64, scratch_operands = 0 : i64, tpu.core_type = #tpu.core_type<tc>, window_params = [{transform_indices = @transform_0, window_bounds = array<i64: 128, 32>}, {pipeline_mode = #tpu.pipeline_mode<synchronous>, transform_indices = @transform_1, window_bounds = array<i64: 64, 32>}, {pipeline_mode = #tpu.pipeline_mode<synchronous>, transform_indices = @transform_2, window_bounds = array<i64: 64, 1>}, {pipeline_mode = #tpu.pipeline_mode<synchronous>, transform_indices = @transform_3, window_bounds = array<i64: 32, 64>}, {pipeline_mode = #tpu.pipeline_mode<synchronous>, transform_indices = @transform_4, window_bounds = array<i64: 32, 1>}, {pipeline_mode = #tpu.pipeline_mode<synchronous>, transform_indices = @transform_5, window_bounds = array<i64: 1, 32>}, {pipeline_mode = #tpu.pipeline_mode<synchronous>, transform_indices = @transform_6, window_bounds = array<i64: 1, 1>}, {transform_indices = @transform_7, window_bounds = array<i64: 1, 128>}]} {
    %c0 = arith.constant 0 : index
    %c0_0 = arith.constant 0 : index
    %0 = vector.load %arg2[%c0, %c0_0] : memref<64x32xf32, #tpu.memory_space<vmem>>, vector<64x32xf32>
    %c0_1 = arith.constant 0 : index
    %c0_2 = arith.constant 0 : index
    %1 = vector.load %arg1[%c0_1, %c0_2] : memref<128x32xf32, #tpu.memory_space<vmem>>, vector<128x32xf32>
    %cst = arith.constant dense<0.000000e+00> : vector<64x128xf32>
    %2 = tpu.matmul %0, %1, %cst {dimension_numbers = #tpu.dot_dimension_numbers<[1], [1], [0], [0], [0, 0, 1, 0], [], []>} : vector<64x32xf32>, vector<128x32xf32>, vector<64x128xf32> -> vector<64x128xf32>
    %c0_3 = arith.constant 0 : index
    %c0_4 = arith.constant 0 : index
    %3 = vector.load %arg3[%c0_3, %c0_4] : memref<64x1xf32, #tpu.memory_space<vmem>>, vector<64x1xf32>
    %4 = vector.broadcast %3 : vector<64x1xf32> to vector<64x128xf32>
    %5 = arith.addf %2, %4 : vector<64x128xf32>
    %cst_5 = arith.constant 0.000000e+00 : f32
    %6 = vector.broadcast %cst_5 : f32 to vector<64x128xf32>
    %7 = arith.maximumf %5, %6 : vector<64x128xf32>
    %c0_6 = arith.constant 0 : index
    %c0_7 = arith.constant 0 : index
    %8 = vector.load %arg4[%c0_6, %c0_7] : memref<32x64xf32, #tpu.memory_space<vmem>>, vector<32x64xf32>
    %cst_8 = arith.constant dense<0.000000e+00> : vector<32x128xf32>
    %9 = tpu.matmul %8, %7, %cst_8 {dimension_numbers = #tpu.dot_dimension_numbers<[1], [0], [0], [1], [0, 0, 1, 1], [], []>} : vector<32x64xf32>, vector<64x128xf32>, vector<32x128xf32> -> vector<32x128xf32>
    %c0_9 = arith.constant 0 : index
    %c0_10 = arith.constant 0 : index
    %10 = vector.load %arg5[%c0_9, %c0_10] : memref<32x1xf32, #tpu.memory_space<vmem>>, vector<32x1xf32>
    %11 = vector.broadcast %10 : vector<32x1xf32> to vector<32x128xf32>
    %12 = arith.addf %9, %11 : vector<32x128xf32>
    %cst_11 = arith.constant 0.000000e+00 : f32
    %13 = vector.broadcast %cst_11 : f32 to vector<32x128xf32>
    %14 = arith.maximumf %12, %13 : vector<32x128xf32>
    %c0_12 = arith.constant 0 : index
    %c0_13 = arith.constant 0 : index
    %15 = vector.load %arg6[%c0_12, %c0_13] : memref<1x32xf32, #tpu.memory_space<vmem>>, vector<1x32xf32>
    %cst_14 = arith.constant dense<0.000000e+00> : vector<1x128xf32>
    %16 = tpu.matmul %15, %14, %cst_14 {dimension_numbers = #tpu.dot_dimension_numbers<[1], [0], [0], [1], [0, 0, 1, 1], [], []>} : vector<1x32xf32>, vector<32x128xf32>, vector<1x128xf32> -> vector<1x128xf32>
    %c0_15 = arith.constant 0 : index
    %c0_16 = arith.constant 0 : index
    %17 = vector.load %arg7[%c0_15, %c0_16] : memref<1x1xf32, #tpu.memory_space<vmem>>, vector<1x1xf32>
    %18 = vector.broadcast %17 : vector<1x1xf32> to vector<1x128xf32>
    %19 = arith.addf %16, %18 : vector<1x128xf32>
    %c0_17 = arith.constant 0 : index
    %c0_18 = arith.constant 0 : index
    %20 = vector.load %arg8[%c0_17, %c0_18] : memref<1x128xf32, #tpu.memory_space<vmem>>, vector<1x128xf32>
    tpu.vector_store %arg8[%c0_17, %c0_18], %19 {strides = array<i32>} : memref<1x128xf32, #tpu.memory_space<vmem>>, vector<1x128xf32>,
    return
  }
  func.func @transform_0(%arg0: i32) -> (i32, i32) {
    %c0_i32 = arith.constant 0 : i32
    %c0_i32_0 = arith.constant 0 : i32
    return %arg0, %c0_i32 : i32, i32
  }
  func.func @transform_1(%arg0: i32) -> (i32, i32) {
    %c0_i32 = arith.constant 0 : i32
    %c0_i32_0 = arith.constant 0 : i32
    %c0_i32_1 = arith.constant 0 : i32
    return %c0_i32, %c0_i32_0 : i32, i32
  }
  func.func @transform_2(%arg0: i32) -> (i32, i32) {
    %c0_i32 = arith.constant 0 : i32
    %c0_i32_0 = arith.constant 0 : i32
    %c0_i32_1 = arith.constant 0 : i32
    return %c0_i32, %c0_i32_0 : i32, i32
  }
  func.func @transform_3(%arg0: i32) -> (i32, i32) {
    %c0_i32 = arith.constant 0 : i32
    %c0_i32_0 = arith.constant 0 : i32
    %c0_i32_1 = arith.constant 0 : i32
    return %c0_i32, %c0_i32_0 : i32, i32
  }
  func.func @transform_4(%arg0: i32) -> (i32, i32) {
    %c0_i32 = arith.constant 0 : i32
    %c0_i32_0 = arith.constant 0 : i32
    %c0_i32_1 = arith.constant 0 : i32
    return %c0_i32, %c0_i32_0 : i32, i32
  }
  func.func @transform_5(%arg0: i32) -> (i32, i32) {
    %c0_i32 = arith.constant 0 : i32
    %c0_i32_0 = arith.constant 0 : i32
    %c0_i32_1 = arith.constant 0 : i32
    return %c0_i32, %c0_i32_0 : i32, i32
  }
  func.func @transform_6(%arg0: i32) -> (i32, i32) {
    %c0_i32 = arith.constant 0 : i32
    %c0_i32_0 = arith.constant 0 : i32
    %c0_i32_1 = arith.constant 0 : i32
    return %c0_i32, %c0_i32_0 : i32, i32
  }
  func.func @transform_7(%arg0: i32) -> (i32, i32) {
    %c0_i32 = arith.constant 0 : i32
    %c0_i32_0 = arith.constant 0 : i32
    return %c0_i32, %arg0 : i32, i32
  }
}

</mosaic_0001>

<llo_original>
// kernel: recommender_forward.1
$region0: #{recommender_forward.1}
  #allocation0 [shape = 'u32[]', space=smem, size = 0x4, offset = 0x4, fixed_abs, tag = 'smem constant byte address 0x4 - core index']
  #allocation1 [shape = 'u32[144,128]{1,0:T(1,128)}', space=vmem, size = 0x12000, scoped, tag = 'internal scratch']
  #allocation2 [shape = 'f32[1,1]{1,0:T(1,128)S(1)}', space=vmem, size = 0x200, scoped, tag = 'scoped memory for recommender_forward.1']
  %s0 = inlined_call_operand.vmem [shape: f32[8,32], index: 0, kind: input, shape index: {}]
  %s1 = inlined_call_operand.vmem [shape: f32[64,32], index: 1, kind: input, shape index: {}]
  %s2 = inlined_call_operand.vmem [shape: f32[64,1], index: 2, kind: input, shape index: {}]
  %s3 = inlined_call_operand.vmem [shape: f32[32,64], index: 3, kind: input, shape index: {}]
  %s4 = inlined_call_operand.vmem [shape: f32[32,1], index: 4, kind: input, shape index: {}]
  %s5 = inlined_call_operand.vmem [shape: f32[1,32], index: 5, kind: input, shape index: {}]
  %s6 = inlined_call_operand.<no memory space> [shape: f32[1,1], index: 6, kind: input, shape index: {}]
  %s7 = inlined_call_operand.hbm [shape: f32[1,8], index: 7, kind: output, shape index: {}]
  %s8 = sld [smem:[#allocation0]]
  $region38: #{recommender_forward.1} parent=0
    _
  %s10 = ssub.s32 1, %s8
  %s11 = scalar_select 0, %s10, %s8
  %v12 = vstv %s6
  %13 = vst [vmem:[#allocation2] sm:$0x1] %v12
  $region1: #{recommender_forward.1} parent=0
    #allocation3 [shape = 'u8[512]{0}', space=vmem, size = 0x400, scoped, tag = 'output window, operand 0, single buffered']
    #allocation4 [shape = 's32[1]{0}', space=sflag, size = 0x4, scoped, tag = 'scoped memory for recommender_forward.1']
    %14 = vsyncpa [#allocation4], 0
    // Predicated region
    $region2: #{recommender_forward.1} parent=1 // pred_check
      _
    $region3: #{recommender_forward.1} parent=1 // pred_check_branch
      %16 = sbr.rel (0) target = $region5
    $region4: #{recommender_forward.1} parent=1 // pred_region
      _
    $region5: #{recommender_forward.1} parent=1 // pred_fallthru
      _
    // Predicated region
    $region6: #{recommender_forward.1} parent=1 // pred_check
      _
    $region7: #{recommender_forward.1} parent=1 // pred_check_branch
      %18 = sbr.rel (0) target = $region9
    $region8: #{recommender_forward.1} parent=1 // pred_region
      _
    $region9: #{recommender_forward.1} parent=1 // pred_fallthru
      _
    // Predicated region
    $region10: #{recommender_forward.1} parent=1 // pred_check
      _
    $region11: #{recommender_forward.1} parent=1 // pred_check_branch
      %20 = sbr.rel (0) target = $region13
    $region12: #{recommender_forward.1} parent=1 // pred_region
      _
    $region13: #{recommender_forward.1} parent=1 // pred_fallthru
      _
    // Predicated region
    $region14: #{recommender_forward.1} parent=1 // pred_check
      _
    $region15: #{recommender_forward.1} parent=1 // pred_check_branch
      %22 = sbr.rel (0) target = $region17
    $region16: #{recommender_forward.1} parent=1 // pred_region
      _
    $region17: #{recommender_forward.1} parent=1 // pred_fallthru
      _
    // Predicated region
    $region18: #{recommender_forward.1} parent=1 // pred_check
      _
    $region19: #{recommender_forward.1} parent=1 // pred_check_branch
      %24 = sbr.rel (0) target = $region21
    $region20: #{recommender_forward.1} parent=1 // pred_region
      _
    $region21: #{recommender_forward.1} parent=1 // pred_fallthru
      _
    // Predicated region
    $region22: #{recommender_forward.1} parent=1 // pred_check
      _
    $region23: #{recommender_forward.1} parent=1 // pred_check_branch
      %26 = sbr.rel (0) target = $region25
    $region24: #{recommender_forward.1} parent=1 // pred_region
      _
    $region25: #{recommender_forward.1} parent=1 // pred_fallthru
      _
    // Predicated region
    $region26: #{recommender_forward.1} parent=1 // pred_check
      _
    $region27: #{recommender_forward.1} parent=1 // pred_check_branch
      %28 = sbr.rel (0) target = $region29
    $region28: #{recommender_forward.1} parent=1 // pred_region
      _
    $region29: #{recommender_forward.1} parent=1 // pred_fallthru
      _
    %v29 = vld [vmem:[%s1] sm:$0xff]
    %v30 = vld [vmem:[%s1 + $0x8] sm:$0xff]
    %v31 = vld [vmem:[%s1 + $0x10] sm:$0xff]
    %v32 = vld [vmem:[%s1 + $0x18] sm:$0xff]
    %v33 = vld [vmem:[%s1 + $0x20] sm:$0xff]
    %v34 = vld [vmem:[%s1 + $0x28] sm:$0xff]
    %v35 = vld [vmem:[%s1 + $0x30] sm:$0xff]
    %v36 = vld [vmem:[%s1 + $0x38] sm:$0xff]
    %v37 = vld [vmem:[%s0] sm:$0xff]
    %v38 = vld [vmem:[%s0 + $0x8] sm:$0xff]
    %v39 = vld [vmem:[%s0 + $0x10] sm:$0xff]
    %v40 = vld [vmem:[%s0 + $0x18] sm:$0xff]
    %v41 = vld [vmem:[%s0 + $0x20] sm:$0xff]
    %v42 = vld [vmem:[%s0 + $0x28] sm:$0xff]
    %v43 = vld [vmem:[%s0 + $0x30] sm:$0xff]
    %v44 = vld [vmem:[%s0 + $0x38] sm:$0xff]
    %v45 = vld [vmem:[%s0 + $0x40] sm:$0xff]
    %v46 = vld [vmem:[%s0 + $0x48] sm:$0xff]
    %v47 = vld [vmem:[%s0 + $0x50] sm:$0xff]
    %v48 = vld [vmem:[%s0 + $0x58] sm:$0xff]
    %v49 = vld [vmem:[%s0 + $0x60] sm:$0xff]
    %v50 = vld [vmem:[%s0 + $0x68] sm:$0xff]
    %v51 = vld [vmem:[%s0 + $0x70] sm:$0xff]
    %v52 = vld [vmem:[%s0 + $0x78] sm:$0xff]
    %v53 = vld [vmem:[%s2] sm:$0xff]
    %v54 = vld [vmem:[%s2 + $0x8] sm:$0xff]
    %v55 = vld [vmem:[%s2 + $0x10] sm:$0xff]
    %v56 = vld [vmem:[%s2 + $0x18] sm:$0xff]
    %v57 = vld [vmem:[%s2 + $0x20] sm:$0xff]
    %v58 = vld [vmem:[%s2 + $0x28] sm:$0xff]
    %v59 = vld [vmem:[%s2 + $0x30] sm:$0xff]
    %v60 = vld [vmem:[%s2 + $0x38] sm:$0xff]
    %62 = vset.pattern.permute.xlu0 0
    %63 = vperm.xlu0 %62, %v53
    %v64 = vpop.permute.xlu0 %63
    %67 = vset.pattern.permute.xlu0 0
    %68 = vperm.xlu0 %67, %v54
    %v69 = vpop.permute.xlu0 %68
    %72 = vset.pattern.permute.xlu0 0
    %73 = vperm.xlu0 %72, %v55
    %v74 = vpop.permute.xlu0 %73
    %77 = vset.pattern.permute.xlu0 0
    %78 = vperm.xlu0 %77, %v56
    %v79 = vpop.permute.xlu0 %78
    %82 = vset.pattern.permute.xlu0 0
    %83 = vperm.xlu0 %82, %v57
    %v84 = vpop.permute.xlu0 %83
    %87 = vset.pattern.permute.xlu0 0
    %88 = vperm.xlu0 %87, %v58
    %v89 = vpop.permute.xlu0 %88
    %92 = vset.pattern.permute.xlu0 0
    %93 = vperm.xlu0 %92, %v59
    %v94 = vpop.permute.xlu0 %93
    %97 = vset.pattern.permute.xlu0 0
    %98 = vperm.xlu0 %97, %v60
    %v99 = vpop.permute.xlu0 %98
    %vm101 = vcmask 261120
    %v103 = vsel %vm101, %v29, 0
    %v106 = vsel %vm101, %v30, 0
    %v109 = vsel %vm101, %v31, 0
    %v112 = vsel %vm101, %v32, 0
    %v115 = vsel %vm101, %v33, 0
    %v118 = vsel %vm101, %v34, 0
    %v121 = vsel %vm101, %v35, 0
    %v124 = vsel %vm101, %v36, 0
    %v127 = vsel %vm101, %v37, 0
    %v130 = vsel %vm101, %v38, 0
    %v133 = vsel %vm101, %v39, 0
    %v136 = vsel %vm101, %v40, 0
    %v139 = vsel %vm101, %v41, 0
    %v142 = vsel %vm101, %v42, 0
    %v145 = vsel %vm101, %v43, 0
    %v148 = vsel %vm101, %v44, 0
    %v151 = vsel %vm101, %v45, 0
    %v154 = vsel %vm101, %v46, 0
    %v157 = vsel %vm101, %v47, 0
    %v160 = vsel %vm101, %v48, 0
    %v163 = vsel %vm101, %v49, 0
    %v166 = vsel %vm101, %v50, 0
    %v169 = vsel %vm101, %v51, 0
    %v172 = vsel %vm101, %v52, 0
    %174 = vmatprep.subr.mxu0 0.0
    %175 = vmatpush1.xpose.msra.mxu0 %v127
    %176 = vmatprep.subr.mxu0 0.0
    %177 = vmatpush1.xpose.msra.mxu0 %v130
    %178 = vmatprep.subr.mxu0 0.0
    %179 = vmatpush1.xpose.msra.mxu0 %v133
    %180 = vmatprep.subr.mxu0 0.0
    %181 = vmatpush1.xpose.msra.mxu0 %v136
    %182 = vmatprep.subr.mxu0 0.0
    %183 = vmatpush1.xpose.msra.mxu0 %v139
    %184 = vmatprep.subr.mxu0 0.0
    %185 = vmatpush1.xpose.msra.mxu0 %v142
    %186 = vmatprep.subr.mxu0 0.0
    %187 = vmatpush1.xpose.msra.mxu0 %v145
    %188 = vmatprep.subr.mxu0 0.0
    %189 = vmatpush1.xpose.msra.mxu0 %v148
    %190 = vmatprep.subr.mxu0 0.0
    %191 = vmatpush1.xpose.msra.mxu0 %v151
    %192 = vmatprep.subr.mxu0 0.0
    %193 = vmatpush1.xpose.msra.mxu0 %v154
    %194 = vmatprep.subr.mxu0 0.0
    %195 = vmatpush1.xpose.msra.mxu0 %v157
    %196 = vmatprep.subr.mxu0 0.0
    %197 = vmatpush1.xpose.msra.mxu0 %v160
    %198 = vmatprep.subr.mxu0 0.0
    %199 = vmatpush1.xpose.msra.mxu0 %v163
    %200 = vmatprep.subr.mxu0 0.0
    %201 = vmatpush1.xpose.msra.mxu0 %v166
    %202 = vmatprep.subr.mxu0 0.0
    %203 = vmatpush1.xpose.msra.mxu0 %v169
    %204 = vmatprep.subr.mxu0 0.0
    %205 = vmatpush1.xpose.msra.mxu0 %v172
    %206 = vmatprep.subr.mxu0 0.0
    %207 = vmatpush1.xpose.msra.mxu0 0.0
    %208 = vmatprep.subr.mxu0 0.0
    %209 = vmatpush1.xpose.msra.mxu0 0.0
    %210 = vmatprep.subr.mxu0 0.0
    %211 = vmatpush1.xpose.msra.mxu0 0.0
    %212 = vmatprep.subr.mxu0 0.0
    %213 = vmatpush1.xpose.msra.mxu0 0.0
    %214 = vmatprep.subr.mxu0 0.0
    %215 = vmatpush1.xpose.msra.mxu0 0.0
    %216 = vmatprep.subr.mxu0 0.0
    %217 = vmatpush1.xpose.msra.mxu0 0.0
    %218 = vmatprep.subr.mxu0 0.0
    %219 = vmatpush1.xpose.msra.mxu0 0.0
    %220 = vmatprep.subr.mxu0 0.0
    %221 = vmatpush1.xpose.msra.mxu0 0.0
    %222 = vmatprep.subr.mxu0 0.0
    %223 = vmatpush1.xpose.msra.mxu0 0.0
    %224 = vmatprep.subr.mxu0 0.0
    %225 = vmatpush1.xpose.msra.mxu0 0.0
    %226 = vmatprep.subr.mxu0 0.0
    %227 = vmatpush1.xpose.msra.mxu0 0.0
    %228 = vmatprep.subr.mxu0 0.0
    %229 = vmatpush1.xpose.msra.mxu0 0.0
    %230 = vmatprep.subr.mxu0 0.0
    %231 = vmatpush1.xpose.msra.mxu0 0.0
    %232 = vmatprep.subr.mxu0 0.0
    %233 = vmatpush1.xpose.msra.mxu0 0.0
    %234 = vmatprep.subr.mxu0 0.0
    %235 = vmatpush1.xpose.msra.mxu0 0.0
    %236 = vmatprep.subr.mxu0 0.0
    %237 = vmatpush1.xpose.msra.mxu0 0.0
    %238 = vmatprep.mubr.f32.mxu0 0.0
    %239 = vmatmul.mubr.f32.gmra.mrb[0].mxu0 %v103
    %v240 = vpop.f32.mrb[0].mxu0
    %v241 = vadd.f32 %v64, %v240
    %v242 = vpop.f32.mrb[0].mxu0
    %243 = vmatprep.mubr.f32.mxu0 0.0
    %244 = vmatmul.mubr.f32.gmra.mrb[0].mxu0 %v106
    %v245 = vpop.f32.mrb[0].mxu0
    %v246 = vadd.f32 %v69, %v245
    %v247 = vpop.f32.mrb[0].mxu0
    %248 = vmatprep.mubr.f32.mxu0 0.0
    %249 = vmatmul.mubr.f32.gmra.mrb[0].mxu0 %v109
    %v250 = vpop.f32.mrb[0].mxu0
    %v251 = vadd.f32 %v74, %v250
    %v252 = vpop.f32.mrb[0].mxu0
    %253 = vmatprep.mubr.f32.mxu0 0.0
    %254 = vmatmul.mubr.f32.gmra.mrb[0].mxu0 %v112
    %v255 = vpop.f32.mrb[0].mxu0
    %v256 = vadd.f32 %v79, %v255
    %v257 = vpop.f32.mrb[0].mxu0
    %258 = vmatprep.mubr.f32.mxu0 0.0
    %259 = vmatmul.mubr.f32.gmra.mrb[0].mxu0 %v115
    %v260 = vpop.f32.mrb[0].mxu0
    %v261 = vadd.f32 %v84, %v260
    %v262 = vpop.f32.mrb[0].mxu0
    %263 = vmatprep.mubr.f32.mxu0 0.0
    %264 = vmatmul.mubr.f32.gmra.mrb[0].mxu0 %v118
    %v265 = vpop.f32.mrb[0].mxu0
    %v266 = vadd.f32 %v89, %v265
    %v267 = vpop.f32.mrb[0].mxu0
    %268 = vmatprep.mubr.f32.mxu0 0.0
    %269 = vmatmul.mubr.f32.gmra.mrb[0].mxu0 %v121
    %v270 = vpop.f32.mrb[0].mxu0
    %v271 = vadd.f32 %v94, %v270
    %v272 = vpop.f32.mrb[0].mxu0
    %273 = vmatprep.mubr.f32.mxu0 0.0
    %274 = vmatmul.mubr.f32.gmra.mrb[0].mxu0 %v124
    %v275 = vpop.f32.mrb[0].mxu0
    %v276 = vadd.f32 %v99, %v275
    %v277 = vpop.f32.mrb[0].mxu0
    %278 = vdwg.mxu0
    %v279 = vmax.f32 %v241, 0.0
    %v280 = vmax.f32 %v246, 0.0
    %v281 = vmax.f32 %v251, 0.0
    %v282 = vmax.f32 %v256, 0.0
    %v283 = vmax.f32 %v261, 0.0
    %v284 = vmax.f32 %v266, 0.0
    %v285 = vmax.f32 %v271, 0.0
    %v286 = vmax.f32 %v276, 0.0
    %v287 = vld [vmem:[%s3] sm:$0xff]
    %v288 = vld [vmem:[%s3 + $0x8] sm:$0xff]
    %v289 = vld [vmem:[%s3 + $0x10] sm:$0xff]
    %v290 = vld [vmem:[%s3 + $0x18] sm:$0xff]
    %v291 = vld [vmem:[%s4] sm:$0xff]
    %v292 = vld [vmem:[%s4 + $0x8] sm:$0xff]
    %v293 = vld [vmem:[%s4 + $0x10] sm:$0xff]
    %v294 = vld [vmem:[%s4 + $0x18] sm:$0xff]
    %296 = vset.pattern.permute.xlu0 0
    %297 = vperm.xlu0 %296, %v291
    %v298 = vpop.permute.xlu0 %297
    %301 = vset.pattern.permute.xlu0 0
    %302 = vperm.xlu0 %301, %v292
    %v303 = vpop.permute.xlu0 %302
    %306 = vset.pattern.permute.xlu0 0
    %307 = vperm.xlu0 %306, %v293
    %v308 = vpop.permute.xlu0 %307
    %311 = vset.pattern.permute.xlu0 0
    %312 = vperm.xlu0 %311, %v294
    %v313 = vpop.permute.xlu0 %312
    %vm315 = vcmask 523264
    %v317 = vsel %vm315, %v287, 0
    %v320 = vsel %vm315, %v288, 0
    %v323 = vsel %vm315, %v289, 0
    %v326 = vsel %vm315, %v290, 0
    %328 = vmatprep.subr.mxu0 0.0
    %329 = vmatpush1.msra.mxu0 %v279
    %330 = vmatprep.subr.mxu0 0.0
    %331 = vmatpush1.msra.mxu0 %v280
    %332 = vmatprep.subr.mxu0 0.0
    %333 = vmatpush1.msra.mxu0 %v281
    %334 = vmatprep.subr.mxu0 0.0
    %335 = vmatpush1.msra.mxu0 %v282
    %336 = vmatprep.subr.mxu0 0.0
    %337 = vmatpush1.msra.mxu0 %v283
    %338 = vmatprep.subr.mxu0 0.0
    %339 = vmatpush1.msra.mxu0 %v284
    %340 = vmatprep.subr.mxu0 0.0
    %341 = vmatpush1.msra.mxu0 %v285
    %342 = vmatprep.subr.mxu0 0.0
    %343 = vmatpush1.msra.mxu0 %v286
    %344 = vmatprep.subr.mxu0 0.0
    %345 = vmatpush1.msra.mxu0 0.0
    %346 = vmatprep.subr.mxu0 0.0
    %347 = vmatpush1.msra.mxu0 0.0
    %348 = vmatprep.subr.mxu0 0.0
    %349 = vmatpush1.msra.mxu0 0.0
    %350 = vmatprep.subr.mxu0 0.0
    %351 = vmatpush1.msra.mxu0 0.0
    %352 = vmatprep.subr.mxu0 0.0
    %353 = vmatpush1.msra.mxu0 0.0
    %354 = vmatprep.subr.mxu0 0.0
    %355 = vmatpush1.msra.mxu0 0.0
    %356 = vmatprep.subr.mxu0 0.0
    %357 = vmatpush1.msra.mxu0 0.0
    %358 = vmatprep.subr.mxu0 0.0
    %359 = vmatpush1.msra.mxu0 0.0
    %360 = vmatprep.subr.mxu0 0.0
    %361 = vmatpush1.msra.mxu0 0.0
    %362 = vmatprep.subr.mxu0 0.0
    %363 = vmatpush1.msra.mxu0 0.0
    %364 = vmatprep.subr.mxu0 0.0
    %365 = vmatpush1.msra.mxu0 0.0
    %366 = vmatprep.subr.mxu0 0.0
    %367 = vmatpush1.msra.mxu0 0.0
    %368 = vmatprep.subr.mxu0 0.0
    %369 = vmatpush1.msra.mxu0 0.0
    %370 = vmatprep.subr.mxu0 0.0
    %371 = vmatpush1.msra.mxu0 0.0
    %372 = vmatprep.subr.mxu0 0.0
    %373 = vmatpush1.msra.mxu0 0.0
    %374 = vmatprep.subr.mxu0 0.0
    %375 = vmatpush1.msra.mxu0 0.0
    %376 = vmatprep.subr.mxu0 0.0
    %377 = vmatpush1.msra.mxu0 0.0
    %378 = vmatprep.subr.mxu0 0.0
    %379 = vmatpush1.msra.mxu0 0.0
    %380 = vmatprep.subr.mxu0 0.0
    %381 = vmatpush1.msra.mxu0 0.0
    %382 = vmatprep.subr.mxu0 0.0
    %383 = vmatpush1.msra.mxu0 0.0
    %384 = vmatprep.subr.mxu0 0.0
    %385 = vmatpush1.msra.mxu0 0.0
    %386 = vmatprep.subr.mxu0 0.0
    %387 = vmatpush1.msra.mxu0 0.0
    %388 = vmatprep.subr.mxu0 0.0
    %389 = vmatpush1.msra.mxu0 0.0
    %390 = vmatprep.subr.mxu0 0.0
    %391 = vmatpush1.msra.mxu0 0.0
    %392 = vmatprep.mubr.f32.mxu0 0.0
    %393 = vmatmul.mubr.f32.gmra.mrb[0].mxu0 %v317
    %v394 = vpop.f32.mrb[0].mxu0
    %v395 = vadd.f32 %v298, %v394
    %v396 = vpop.f32.mrb[0].mxu0
    %397 = vmatprep.mubr.f32.mxu0 0.0
    %398 = vmatmul.mubr.f32.gmra.mrb[0].mxu0 %v320
    %v399 = vpop.f32.mrb[0].mxu0
    %v400 = vadd.f32 %v303, %v399
    %v401 = vpop.f32.mrb[0].mxu0
    %402 = vmatprep.mubr.f32.mxu0 0.0
    %403 = vmatmul.mubr.f32.gmra.mrb[0].mxu0 %v323
    %v404 = vpop.f32.mrb[0].mxu0
    %v405 = vadd.f32 %v308, %v404
    %v406 = vpop.f32.mrb[0].mxu0
    %407 = vmatprep.mubr.f32.mxu0 0.0
    %408 = vmatmul.mubr.f32.gmra.mrb[0].mxu0 %v326
    %v409 = vpop.f32.mrb[0].mxu0
    %v410 = vadd.f32 %v313, %v409
    %v411 = vpop.f32.mrb[0].mxu0
    %412 = vdwg.mxu0
    %v413 = vmax.f32 %v395, 0.0
    %v414 = vmax.f32 %v400, 0.0
    %v415 = vmax.f32 %v405, 0.0
    %v416 = vmax.f32 %v410, 0.0
    %v417 = vld [vmem:[%s5] sm:$0x1]
    %v418 = vld [vmem:[#allocation2] sm:$0x1]
    %420 = vset.pattern.permute.xlu0 0
    %421 = vperm.xlu0 %420, %v418
    %v422 = vpop.permute.xlu0 %421
    %v424 = vlaneseq
    %v425 = vshrl.u32 %v424, 7
    %v426 = vsub.s32 0, %v425
    %v427 = vrot.slane %v422, %v426
    %v429 = vsel %vm101, %v417, 0
    %431 = vmatprep.subr.mxu0 0.0
    %432 = vmatpush1.msra.mxu0 %v413
    %433 = vmatprep.subr.mxu0 0.0
    %434 = vmatpush1.msra.mxu0 %v414
    %435 = vmatprep.subr.mxu0 0.0
    %436 = vmatpush1.msra.mxu0 %v415
    %437 = vmatprep.subr.mxu0 0.0
    %438 = vmatpush1.msra.mxu0 %v416
    %439 = vmatprep.subr.mxu0 0.0
    %440 = vmatpush1.msra.mxu0 0.0
    %441 = vmatprep.subr.mxu0 0.0
    %442 = vmatpush1.msra.mxu0 0.0
    %443 = vmatprep.subr.mxu0 0.0
    %444 = vmatpush1.msra.mxu0 0.0
    %445 = vmatprep.subr.mxu0 0.0
    %446 = vmatpush1.msra.mxu0 0.0
    %447 = vmatprep.subr.mxu0 0.0
    %448 = vmatpush1.msra.mxu0 0.0
    %449 = vmatprep.subr.mxu0 0.0
    %450 = vmatpush1.msra.mxu0 0.0
    %451 = vmatprep.subr.mxu0 0.0
    %452 = vmatpush1.msra.mxu0 0.0
    %453 = vmatprep.subr.mxu0 0.0
    %454 = vmatpush1.msra.mxu0 0.0
    %455 = vmatprep.subr.mxu0 0.0
    %456 = vmatpush1.msra.mxu0 0.0
    %457 = vmatprep.subr.mxu0 0.0
    %458 = vmatpush1.msra.mxu0 0.0
    %459 = vmatprep.subr.mxu0 0.0
    %460 = vmatpush1.msra.mxu0 0.0
    %461 = vmatprep.subr.mxu0 0.0
    %462 = vmatpush1.msra.mxu0 0.0
    %463 = vmatprep.subr.mxu0 0.0
    %464 = vmatpush1.msra.mxu0 0.0
    %465 = vmatprep.subr.mxu0 0.0
    %466 = vmatpush1.msra.mxu0 0.0
    %467 = vmatprep.subr.mxu0 0.0
    %468 = vmatpush1.msra.mxu0 0.0
    %469 = vmatprep.subr.mxu0 0.0
    %470 = vmatpush1.msra.mxu0 0.0
    %471 = vmatprep.subr.mxu0 0.0
    %472 = vmatpush1.msra.mxu0 0.0
    %473 = vmatprep.subr.mxu0 0.0
    %474 = vmatpush1.msra.mxu0 0.0
    %475 = vmatprep.subr.mxu0 0.0
    %476 = vmatpush1.msra.mxu0 0.0
    %477 = vmatprep.subr.mxu0 0.0
    %478 = vmatpush1.msra.mxu0 0.0
    %479 = vmatprep.subr.mxu0 0.0
    %480 = vmatpush1.msra.mxu0 0.0
    %481 = vmatprep.subr.mxu0 0.0
    %482 = vmatpush1.msra.mxu0 0.0
    %483 = vmatprep.subr.mxu0 0.0
    %484 = vmatpush1.msra.mxu0 0.0
    %485 = vmatprep.subr.mxu0 0.0
    %486 = vmatpush1.msra.mxu0 0.0
    %487 = vmatprep.subr.mxu0 0.0
    %488 = vmatpush1.msra.mxu0 0.0
    %489 = vmatprep.subr.mxu0 0.0
    %490 = vmatpush1.msra.mxu0 0.0
    %491 = vmatprep.subr.mxu0 0.0
    %492 = vmatpush1.msra.mxu0 0.0
    %493 = vmatprep.subr.mxu0 0.0
    %494 = vmatpush1.msra.mxu0 0.0
    %495 = vmatprep.mubr.f32.mxu0 0.0
    %496 = vmatmul.mubr.f32.gmra.mrb[0].mxu0 %v429
    %v497 = vpop.f32.mrb[0].mxu0
    %v498 = vadd.f32 %v427, %v497
    %v499 = vpop.f32.mrb[0].mxu0
    %500 = vdwg.mxu0
    %501 = vst [vmem:[#allocation3] sm:$0x1] %v498
    // Predicated region
    $region30: #{recommender_forward.1} parent=1 // pred_check
      _
    $region31: #{recommender_forward.1} parent=1 // pred_check_branch
      %503 = sbr.rel (0) target = $region33
    $region32: #{recommender_forward.1} parent=1 // pred_region
      %s505 = ssub.s32 16, 16
      %506 = vsyncadd [#allocation4], %s505
      %s508 = sshll.u32 [#allocation3], 4
      %s509 = int_to_ptr.vmem [resolvable:$true] %s508
      %511 = dma.vmem_to_hbm [thread:$0]  %s509, 16, %s7, [#allocation4]
    $region33: #{recommender_forward.1} parent=1 // pred_fallthru
      _
    // Predicated region
    $region34: #{recommender_forward.1} parent=1 // pred_check
      _
    $region35: #{recommender_forward.1} parent=1 // pred_check_branch
      %513 = sbr.rel (0) target = $region37
    $region36: #{recommender_forward.1} parent=1 // pred_region
      %514 = dma.done [#allocation4], 16
    $region37: #{recommender_forward.1} parent=1 // pred_fallthru
      _
    %515 = vsyncpa [#allocation4], 1

</llo_original>
